<compile_context>
chip_gen: v6e
topology: v6e:2x2x1
jax: 0.10.0
libtpu: 0.0.40
codegen_flags: <defaults>
</compile_context>

<pallas_src>
import functools

import jax
import jax.numpy as jnp
from jax.experimental import pallas as pl
from jax.experimental.pallas import tpu as pltpu

BN_EPS = 1e-5
_NEG = -1e30  # large negative used to mask padded class columns in the softmax


def _round_up(x, m):
    return (x + m - 1) // m * m


def _head_kernel(x_ref, scale_ref, shift_ref, w_ref, b_ref, tgt_ref,
                 logits_ref, nll_ref, max_acc, min_acc, *, num_classes):
    # x_ref:      [TN, C, THW]  native dtype (spatial on lanes, channels on sublanes)
    # scale/shift:[1, C]  f32   folded BN params
    # w_ref:      [C, KP] f32   (transposed + zero-padded Linear weight)
    # b_ref:      [1, KP] f32   (zero-padded bias)
    # tgt_ref:    [TN, 1] int32
    # max_acc/min_acc: [TN, C] f32 running spatial max / min across the HW grid axis
    s = pl.program_id(1)
    n_s = pl.num_programs(1)
    _, _, thw = x_ref.shape

    # ---- Spatial max & min of this chunk, single pass, native dtype. ----------
    if thw % 128 == 0 and thw > 128:
        lane = 128
        nchunks = thw // 128
        v0 = x_ref[:, :, pl.ds(0, lane)]
        mx0 = jnp.max(v0, axis=-1)                      # [TN, C]
        mn0 = jnp.min(v0, axis=-1)

        def body(k, carry):
            mx, mn = carry
            off = pl.multiple_of(k * lane, lane)
            v = x_ref[:, :, pl.ds(off, lane)]           # loaded once, feeds both
            return (jnp.maximum(mx, jnp.max(v, axis=-1)),
                    jnp.minimum(mn, jnp.min(v, axis=-1)))

        mx, mn = jax.lax.fori_loop(1, nchunks, body, (mx0, mn0),
                                   unroll=(nchunks <= 8))
    else:
        v = x_ref[...]
        mx = jnp.max(v, axis=-1)
        mn = jnp.min(v, axis=-1)

    cmax = mx.astype(jnp.float32)                       # [TN, C] tiny cast only
    cmin = mn.astype(jnp.float32)

    @pl.when(s == 0)
    def _():
        max_acc[...] = cmax
        min_acc[...] = cmin

    @pl.when(s > 0)
    def _():
        max_acc[...] = jnp.maximum(max_acc[...], cmax)
        min_acc[...] = jnp.minimum(min_acc[...], cmin)

    # ---- Epilogue: BN(affine)+ReLU fused with the pool via monotonicity,
    #      Linear, and per-example NLL. Runs once per batch tile. ---------------
    @pl.when(s == n_s - 1)
    def _():
        scale = scale_ref[...]                          # [1, C]
        shift = shift_ref[...]                          # [1, C]
        #   max_hw relu(scale*x + shift)
        # = relu(scale*(scale>=0 ? max_hw x : min_hw x) + shift)
        sel = jnp.where(scale >= 0.0, max_acc[...], min_acc[...])      # [TN, C]
        pooled = jnp.maximum(sel * scale + shift, 0.0)                 # [TN, C]

        logits = jnp.dot(pooled, w_ref[...],
                         preferred_element_type=jnp.float32) + b_ref[...]  # [TN, KP]
        logits_ref[...] = logits

        tn, kp = logits.shape
        cls = jax.lax.broadcasted_iota(jnp.int32, (tn, kp), 1)
        if num_classes < kp:
            masked = jnp.where(cls < num_classes, logits, _NEG)
        else:
            masked = logits
        m = jnp.max(masked, axis=-1, keepdims=True)                    # [TN, 1]
        z = masked - m
        lse = jnp.log(jnp.sum(jnp.exp(z), axis=-1, keepdims=True))     # [TN, 1]
        onehot = cls == tgt_ref[...]                                   # [TN, KP]
        picked = jnp.sum(jnp.where(onehot, z, 0.0), axis=-1, keepdims=True)
        nll_ref[...] = lse - picked                                    # [TN, 1]


def classification_head(x_nchw, gamma, beta, run_mean, run_var, w, b, target):
    """x_nchw: [N, C, H, W] last backbone state.  w: [K, C], b: [K], target: [N] int."""
    N, C, H, W = x_nchw.shape
    K = w.shape[0]
    HW = H * W
    itemsize = jnp.dtype(x_nchw.dtype).itemsize

    # Native layout, free contiguous reshape (no HBM transpose pass).
    x = x_nchw.reshape(N, C, HW)

    # Fold BN params: scale = gamma/sqrt(var+eps), shift = beta - mean*scale.
    scale = (gamma.astype(jnp.float32) *
             jax.lax.rsqrt(run_var.astype(jnp.float32) + BN_EPS)).reshape(1, C)
    shift = (beta.astype(jnp.float32) -
             run_mean.astype(jnp.float32) * scale[0]).reshape(1, C)

    # Pad the class dimension to a lane-dense multiple of 128 (unmasked logits stores).
    KP = max(128, _round_up(K, 128))
    w_p = jnp.zeros((C, KP), jnp.float32).at[:, :K].set(w.T.astype(jnp.float32))
    b_p = jnp.zeros((1, KP), jnp.float32).at[:, :K].set(b.astype(jnp.float32))

    # Batch tiling: multiple of 8, capped at 128, and >= 2 grid steps whenever N allows
    # (megacore sharding on v7x + pipeline overlap even for single-batch-step cases).
    TN = min(128, _round_up(N, 8))
    if N >= 16 and _round_up(N, TN) // TN < 2:
        TN = _round_up((N + 1) // 2, 8)
    N_pad = _round_up(N, TN)
    tgt = target.astype(jnp.int32)
    if N_pad != N:
        x = jnp.pad(x, ((0, N_pad - N), (0, 0), (0, 0)))
        tgt = jnp.pad(tgt, (0, N_pad - N))
    tgt = tgt.reshape(N_pad, 1)

    # Spatial chunking: THW divides HW and is a multiple of 128 (or HW itself);
    # bound the per-step input tile to ~1 MiB so double-buffering stays tiny even
    # under v5e's 16 MiB scoped VMEM / v7x's 64 MiB physical VMEM.
    budget = 1 << 20
    if HW <= 128 or TN * C * HW * itemsize <= budget:
        THW = HW
    else:
        cand = (budget // (TN * C * itemsize)) // 128 * 128
        cand = max(128, min(cand, 1024))
        while cand >= 128 and HW % cand != 0:
            cand -= 128
        THW = cand if cand >= 128 else HW
    S = HW // THW
    grid = (N_pad // TN, S)

    tile_in_bytes = TN * C * THW * itemsize
    vmem_need = (2 * tile_in_bytes                      # double-buffered input tile
                 + 2 * (TN * KP * 4 + TN * 4)           # outputs
                 + C * KP * 4 + KP * 4 + 2 * C * 4      # weights / bias / BN params
                 + 2 * TN * C * 4                       # max/min accumulators
                 + 2 * TN * 4)                          # targets
    vmem_limit = int(min(64 << 20, max(8 << 20, 4 * vmem_need)))

    cost = pl.CostEstimate(
        flops=2 * N_pad * C * HW + 2 * N_pad * C * KP + 8 * N_pad * KP,
        transcendentals=N_pad * KP,
        bytes_accessed=N_pad * C * HW * itemsize
        + 4 * (N_pad * KP + 2 * N_pad + 2 * C + C * KP + KP),
    )

    kernel = functools.partial(_head_kernel, num_classes=K)
    logits_p, nll = pl.pallas_call(
        kernel,
        out_shape=(
            jax.ShapeDtypeStruct((N_pad, KP), jnp.float32),
            jax.ShapeDtypeStruct((N_pad, 1), jnp.float32),
        ),
        grid=grid,
        in_specs=[
            pl.BlockSpec((TN, C, THW), lambda i, s: (i, 0, s)),  # native-layout feature tile
            pl.BlockSpec((1, C), lambda i, s: (0, 0)),           # BN scale
            pl.BlockSpec((1, C), lambda i, s: (0, 0)),           # BN shift
            pl.BlockSpec((C, KP), lambda i, s: (0, 0)),          # Linear weight (padded)
            pl.BlockSpec((1, KP), lambda i, s: (0, 0)),          # Linear bias (padded)
            pl.BlockSpec((TN, 1), lambda i, s: (i, 0)),          # targets
        ],
        out_specs=(
            pl.BlockSpec((TN, KP), lambda i, s: (i, 0)),         # logits (resident over s)
            pl.BlockSpec((TN, 1), lambda i, s: (i, 0)),          # per-example NLL
        ),
        scratch_shapes=[
            pltpu.VMEM((TN, C), jnp.float32),                    # running spatial max
            pltpu.VMEM((TN, C), jnp.float32),                    # running spatial min
        ],
        compiler_params=pltpu.CompilerParams(
            dimension_semantics=("parallel", "arbitrary"),
            vmem_limit_bytes=vmem_limit,
        ),
        cost_estimate=cost,
    )(x, scale, shift, w_p, b_p, tgt)

    logits = logits_p[:N, :K]
    loss = jnp.sum(nll[:N, 0]) / N
    # grad is None in eval / non-RBP mode, matching the reference forward.
    return logits, loss, None


def _reference_head(x, gamma, beta, mean, var, w, b, target):
    h = (x - mean[None, :, None, None]) * (
        gamma[None, :, None, None] / jnp.sqrt(var[None, :, None, None] + BN_EPS)
    ) + beta[None, :, None, None]
    h = jnp.maximum(h, 0.0)
    pooled = jnp.max(h, axis=(2, 3))
    logits = pooled @ w.T + b
    logp = jax.nn.log_softmax(logits, axis=-1)
    loss = -jnp.mean(logp[jnp.arange(x.shape[0]), target])
    return logits, loss


if __name__ == "__main__":
    # Small shapes consistent with the module:
    #   num_features_last_conv = 32, dim_images = 8 (spatial size after strides),
    #   num_classes = 10, batch = 2.
    N, C, H, W, K = 2, 32, 8, 8, 10

    key = jax.random.PRNGKey(0)
    kx, kg, kb, km, kv, kw, kbias, kt = jax.random.split(key, 8)

    x = jax.random.normal(kx, (N, C, H, W), dtype=jnp.float32)       # last backbone state
    gamma = jax.random.normal(kg, (C,), dtype=jnp.float32) * 0.1 + 1.0
    beta = jax.random.normal(kb, (C,), dtype=jnp.float32) * 0.1
    run_mean = jax.random.normal(km, (C,), dtype=jnp.float32) * 0.1
    run_var = jnp.abs(jax.random.normal(kv, (C,), dtype=jnp.float32)) * 0.5 + 0.5
    w = jax.random.normal(kw, (K, C), dtype=jnp.float32) * 0.05      # nn.Linear weight [K, C]
    b = jax.random.normal(kbias, (K,), dtype=jnp.float32) * 0.05
    target = jax.random.randint(kt, (N,), 0, K, dtype=jnp.int32)

    logits, loss, grad = classification_head(x, gamma, beta, run_mean, run_var, w, b, target)
    jax.block_until_ready((logits, loss))

    ref_logits, ref_loss = _reference_head(x, gamma, beta, run_mean, run_var, w, b, target)
    assert jnp.allclose(logits, ref_logits, atol=1e-4, rtol=1e-4), "logits mismatch"
    assert jnp.allclose(loss, ref_loss, atol=1e-4, rtol=1e-4), "loss mismatch"
    assert grad is None

    print("KERNEL_OK")
</pallas_src>

<mosaic_0001>
module attributes {stable_mosaic.version = 11 : i64} {
  func.func @_head_kernel(%arg0: i32, %arg1: i32, %arg2: memref<8x32x64xf32, #tpu.memory_space<vmem>>, %arg3: memref<1x32xf32, #tpu.memory_space<vmem>>, %arg4: memref<1x32xf32, #tpu.memory_space<vmem>>, %arg5: memref<32x128xf32, #tpu.memory_space<vmem>>, %arg6: memref<1x128xf32, #tpu.memory_space<vmem>>, %arg7: memref<8x1xi32, #tpu.memory_space<vmem>>, %arg8: memref<8x128xf32, #tpu.memory_space<vmem>>, %arg9: memref<8x1xf32, #tpu.memory_space<vmem>>, %arg10: memref<8x32xf32, #tpu.memory_space<vmem>>, %arg11: memref<8x32xf32, #tpu.memory_space<vmem>>) attributes {dimension_semantics = [#tpu.dimension_semantics<parallel>, #tpu.dimension_semantics<arbitrary>], iteration_bounds = array<i64: 1, 1>, scalar_prefetch = 0 : i64, scratch_operands = 2 : i64, tpu.core_type = #tpu.core_type<tc>, window_params = [{transform_indices = @transform_0, window_bounds = array<i64: 8, 32, 64>}, {pipeline_mode = #tpu.pipeline_mode<synchronous>, transform_indices = @transform_1, window_bounds = array<i64: 1, 32>}, {pipeline_mode = #tpu.pipeline_mode<synchronous>, transform_indices = @transform_2, window_bounds = array<i64: 1, 32>}, {pipeline_mode = #tpu.pipeline_mode<synchronous>, transform_indices = @transform_3, window_bounds = array<i64: 32, 128>}, {pipeline_mode = #tpu.pipeline_mode<synchronous>, transform_indices = @transform_4, window_bounds = array<i64: 1, 128>}, {transform_indices = @transform_5, window_bounds = array<i64: 8, 1>}, {transform_indices = @transform_6, window_bounds = array<i64: 8, 128>}, {transform_indices = @transform_7, window_bounds = array<i64: 8, 1>}]} {
    %c0 = arith.constant 0 : index
    %c0_0 = arith.constant 0 : index
    %c0_1 = arith.constant 0 : index
    %0 = vector.load %arg2[%c0, %c0_0, %c0_1] : memref<8x32x64xf32, #tpu.memory_space<vmem>>, vector<8x32x64xf32>
    %cst = arith.constant dense<0xFF800000> : vector<8x32xf32>
    %1 = vector.multi_reduction <maximumf>, %0, %cst [2] : vector<8x32x64xf32> to vector<8x32xf32>
    %cst_2 = arith.constant dense<0x7F800000> : vector<8x32xf32>
    %2 = vector.multi_reduction <minimumf>, %0, %cst_2 [2] : vector<8x32x64xf32> to vector<8x32xf32>
    %c0_i32 = arith.constant 0 : i32
    %3 = arith.cmpi eq, %arg1, %c0_i32 : i32
    %4 = arith.extui %3 : i1 to i32
    %c0_i32_3 = arith.constant 0 : i32
    %5 = arith.cmpi ne, %4, %c0_i32_3 : i32
    scf.if %5 {
      %c0_8 = arith.constant 0 : index
      %c0_9 = arith.constant 0 : index
      %12 = vector.load %arg10[%c0_8, %c0_9] : memref<8x32xf32, #tpu.memory_space<vmem>>, vector<8x32xf32>
      tpu.vector_store %arg10[%c0_8, %c0_9], %1 {strides = array<i32>} : memref<8x32xf32, #tpu.memory_space<vmem>>, vector<8x32xf32>,
      %c0_10 = arith.constant 0 : index
      %c0_11 = arith.constant 0 : index
      %13 = vector.load %arg11[%c0_10, %c0_11] : memref<8x32xf32, #tpu.memory_space<vmem>>, vector<8x32xf32>
      tpu.vector_store %arg11[%c0_10, %c0_11], %2 {strides = array<i32>} : memref<8x32xf32, #tpu.memory_space<vmem>>, vector<8x32xf32>,
    } else {
    }
    %c0_i32_4 = arith.constant 0 : i32
    %6 = arith.cmpi sgt, %arg1, %c0_i32_4 : i32
    %7 = arith.extui %6 : i1 to i32
    %c0_i32_5 = arith.constant 0 : i32
    %8 = arith.cmpi ne, %7, %c0_i32_5 : i32
    scf.if %8 {
      %c0_8 = arith.constant 0 : index
      %c0_9 = arith.constant 0 : index
      %12 = vector.load %arg10[%c0_8, %c0_9] : memref<8x32xf32, #tpu.memory_space<vmem>>, vector<8x32xf32>
      %13 = arith.maximumf %12, %1 : vector<8x32xf32>
      %c0_10 = arith.constant 0 : index
      %c0_11 = arith.constant 0 : index
      %14 = vector.load %arg10[%c0_10, %c0_11] : memref<8x32xf32, #tpu.memory_space<vmem>>, vector<8x32xf32>
      tpu.vector_store %arg10[%c0_10, %c0_11], %13 {strides = array<i32>} : memref<8x32xf32, #tpu.memory_space<vmem>>, vector<8x32xf32>,
      %c0_12 = arith.constant 0 : index
      %c0_13 = arith.constant 0 : index
      %15 = vector.load %arg11[%c0_12, %c0_13] : memref<8x32xf32, #tpu.memory_space<vmem>>, vector<8x32xf32>
      %16 = arith.minimumf %15, %2 : vector<8x32xf32>
      %c0_14 = arith.constant 0 : index
      %c0_15 = arith.constant 0 : index
      %17 = vector.load %arg11[%c0_14, %c0_15] : memref<8x32xf32, #tpu.memory_space<vmem>>, vector<8x32xf32>
      tpu.vector_store %arg11[%c0_14, %c0_15], %16 {strides = array<i32>} : memref<8x32xf32, #tpu.memory_space<vmem>>, vector<8x32xf32>,
    } else {
    }
    %c0_i32_6 = arith.constant 0 : i32
    %9 = arith.cmpi eq, %arg1, %c0_i32_6 : i32
    %10 = arith.extui %9 : i1 to i32
    %c0_i32_7 = arith.constant 0 : i32
    %11 = arith.cmpi ne, %10, %c0_i32_7 : i32
    scf.if %11 {
      %c0_8 = arith.constant 0 : index
      %c0_9 = arith.constant 0 : index
      %12 = vector.load %arg3[%c0_8, %c0_9] : memref<1x32xf32, #tpu.memory_space<vmem>>, vector<1x32xf32>
      %c0_10 = arith.constant 0 : index
      %c0_11 = arith.constant 0 : index
      %13 = vector.load %arg4[%c0_10, %c0_11] : memref<1x32xf32, #tpu.memory_space<vmem>>, vector<1x32xf32>
      %cst_12 = arith.constant 0.000000e+00 : f32
      %14 = vector.broadcast %cst_12 : f32 to vector<1x32xf32>
      %15 = arith.cmpf oge, %12, %14 : vector<1x32xf32>
      %c0_13 = arith.constant 0 : index
      %c0_14 = arith.constant 0 : index
      %16 = vector.load %arg10[%c0_13, %c0_14] : memref<8x32xf32, #tpu.memory_space<vmem>>, vector<8x32xf32>
      %c0_15 = arith.constant 0 : index
      %c0_16 = arith.constant 0 : index
      %17 = vector.load %arg11[%c0_15, %c0_16] : memref<8x32xf32, #tpu.memory_space<vmem>>, vector<8x32xf32>
      %18 = vector.shape_cast %15 : vector<1x32xi1> to vector<1x32xi1>
      %19 = vector.broadcast %18 : vector<1x32xi1> to vector<8x32xi1>
      %20 = arith.select %19, %16, %17 : vector<8x32xi1>, vector<8x32xf32>
      %21 = vector.broadcast %12 : vector<1x32xf32> to vector<8x32xf32>
      %22 = arith.mulf %20, %21 : vector<8x32xf32>
      %23 = vector.broadcast %13 : vector<1x32xf32> to vector<8x32xf32>
      %24 = arith.addf %22, %23 : vector<8x32xf32>
      %cst_17 = arith.constant 0.000000e+00 : f32
      %25 = vector.broadcast %cst_17 : f32 to vector<8x32xf32>
      %26 = arith.maximumf %24, %25 : vector<8x32xf32>
      %c0_18 = arith.constant 0 : index
      %c0_19 = arith.constant 0 : index
      %27 = vector.load %arg5[%c0_18, %c0_19] : memref<32x128xf32, #tpu.memory_space<vmem>>, vector<32x128xf32>
      %cst_20 = arith.constant dense<0.000000e+00> : vector<8x128xf32>
      %28 = tpu.matmul %26, %27, %cst_20 {dimension_numbers = #tpu.dot_dimension_numbers<[1], [0], [0], [1], [0, 0, 1, 1], [], []>} : vector<8x32xf32>, vector<32x128xf32>, vector<8x128xf32> -> vector<8x128xf32>
      %c0_21 = arith.constant 0 : index
      %c0_22 = arith.constant 0 : index
      %29 = vector.load %arg6[%c0_21, %c0_22] : memref<1x128xf32, #tpu.memory_space<vmem>>, vector<1x128xf32>
      %30 = vector.broadcast %29 : vector<1x128xf32> to vector<8x128xf32>
      %31 = arith.addf %28, %30 : vector<8x128xf32>
      %c0_23 = arith.constant 0 : index
      %c0_24 = arith.constant 0 : index
      %32 = vector.load %arg8[%c0_23, %c0_24] : memref<8x128xf32, #tpu.memory_space<vmem>>, vector<8x128xf32>
      tpu.vector_store %arg8[%c0_23, %c0_24], %31 {strides = array<i32>} : memref<8x128xf32, #tpu.memory_space<vmem>>, vector<8x128xf32>,
      %33 = tpu.iota {dimensions = array<i32: 1>} : vector<8x128xi32>
      %c10_i32 = arith.constant 10 : i32
      %34 = vector.broadcast %c10_i32 : i32 to vector<8x128xi32>
      %35 = arith.cmpi slt, %33, %34 : vector<8x128xi32>
      %cst_25 = arith.constant -1.000000e+30 : f32
      %36 = vector.broadcast %cst_25 : f32 to vector<8x128xf32>
      %37 = arith.select %35, %31, %36 : vector<8x128xi1>, vector<8x128xf32>
      %cst_26 = arith.constant dense<0xFF800000> : vector<8xf32>
      %38 = vector.multi_reduction <maximumf>, %37, %cst_26 [1] : vector<8x128xf32> to vector<8xf32>
      %39 = vector.shape_cast %38 : vector<8xf32> to vector<8x1xf32>
      %40 = vector.broadcast %39 : vector<8x1xf32> to vector<8x128xf32>
      %41 = arith.subf %37, %40 : vector<8x128xf32>
      %42 = math.exp %41 : vector<8x128xf32>
      %cst_27 = arith.constant dense<0.000000e+00> : vector<8xf32>
      %43 = vector.multi_reduction <add>, %42, %cst_27 [1] : vector<8x128xf32> to vector<8xf32>
      %44 = vector.shape_cast %43 : vector<8xf32> to vector<8x1xf32>
      %45 = math.log %44 : vector<8x1xf32>
      %c0_28 = arith.constant 0 : index
      %c0_29 = arith.constant 0 : index
      %46 = vector.load %arg7[%c0_28, %c0_29] : memref<8x1xi32, #tpu.memory_space<vmem>>, vector<8x1xi32>
      %47 = vector.broadcast %46 : vector<8x1xi32> to vector<8x128xi32>
      %48 = arith.cmpi eq, %33, %47 : vector<8x128xi32>
      %cst_30 = arith.constant 0.000000e+00 : f32
      %49 = vector.broadcast %cst_30 : f32 to vector<8x128xf32>
      %50 = arith.select %48, %41, %49 : vector<8x128xi1>, vector<8x128xf32>
      %cst_31 = arith.constant dense<0.000000e+00> : vector<8xf32>
      %51 = vector.multi_reduction <add>, %50, %cst_31 [1] : vector<8x128xf32> to vector<8xf32>
      %52 = vector.shape_cast %51 : vector<8xf32> to vector<8x1xf32>
      %53 = arith.subf %45, %52 : vector<8x1xf32>
      %c0_32 = arith.constant 0 : index
      %c0_33 = arith.constant 0 : index
      %54 = vector.load %arg9[%c0_32, %c0_33] : memref<8x1xf32, #tpu.memory_space<vmem>>, vector<8x1xf32>
      tpu.vector_store %arg9[%c0_32, %c0_33], %53 {strides = array<i32>} : memref<8x1xf32, #tpu.memory_space<vmem>>, vector<8x1xf32>,
    } else {
    }
    return
  }
  func.func @transform_0(%arg0: i32, %arg1: i32) -> (i32, i32, i32) {
    %c0_i32 = arith.constant 0 : i32
    %c0_i32_0 = arith.constant 0 : i32
    return %arg0, %c0_i32, %arg1 : i32, i32, i32
  }
  func.func @transform_1(%arg0: i32, %arg1: i32) -> (i32, i32) {
    %c0_i32 = arith.constant 0 : i32
    %c0_i32_0 = arith.constant 0 : i32
    %c0_i32_1 = arith.constant 0 : i32
    return %c0_i32, %c0_i32_0 : i32, i32
  }
  func.func @transform_2(%arg0: i32, %arg1: i32) -> (i32, i32) {
    %c0_i32 = arith.constant 0 : i32
    %c0_i32_0 = arith.constant 0 : i32
    %c0_i32_1 = arith.constant 0 : i32
    return %c0_i32, %c0_i32_0 : i32, i32
  }
  func.func @transform_3(%arg0: i32, %arg1: i32) -> (i32, i32) {
    %c0_i32 = arith.constant 0 : i32
    %c0_i32_0 = arith.constant 0 : i32
    %c0_i32_1 = arith.constant 0 : i32
    return %c0_i32, %c0_i32_0 : i32, i32
  }
  func.func @transform_4(%arg0: i32, %arg1: i32) -> (i32, i32) {
    %c0_i32 = arith.constant 0 : i32
    %c0_i32_0 = arith.constant 0 : i32
    %c0_i32_1 = arith.constant 0 : i32
    return %c0_i32, %c0_i32_0 : i32, i32
  }
  func.func @transform_5(%arg0: i32, %arg1: i32) -> (i32, i32) {
    %c0_i32 = arith.constant 0 : i32
    %c0_i32_0 = arith.constant 0 : i32
    return %arg0, %c0_i32 : i32, i32
  }
  func.func @transform_6(%arg0: i32, %arg1: i32) -> (i32, i32) {
    %c0_i32 = arith.constant 0 : i32
    %c0_i32_0 = arith.constant 0 : i32
    return %arg0, %c0_i32 : i32, i32
  }
  func.func @transform_7(%arg0: i32, %arg1: i32) -> (i32, i32) {
    %c0_i32 = arith.constant 0 : i32
    %c0_i32_0 = arith.constant 0 : i32
    return %arg0, %c0_i32 : i32, i32
  }
}

</mosaic_0001>

<llo_original>
// kernel: tpu_custom_call.1
$region0: #{tpu_custom_call.1}
  #allocation0 [shape = 'u32[]', space=smem, size = 0x4, offset = 0x4, fixed_abs, tag = 'smem constant byte address 0x4 - core index']
  #allocation1 [shape = 'u32[144,128]{1,0:T(1,128)}', space=vmem, size = 0x12000, scoped, tag = 'internal scratch']
  #allocation2 [shape = 'f32[8,32]{1,0:T(8,128)}', space=vmem, size = 0x1000, scoped, tag = 'scratch operand']
  #allocation3 [shape = 'f32[8,32]{1,0:T(8,128)}', space=vmem, size = 0x1000, scoped, tag = 'scratch operand']
  %s0 = inlined_call_operand.hbm [shape: f32[8,32,64], index: 0, kind: input, shape index: {}]
  %s1 = inlined_call_operand.vmem [shape: f32[1,32], index: 1, kind: input, shape index: {}]
  %s2 = inlined_call_operand.vmem [shape: f32[1,32], index: 2, kind: input, shape index: {}]
  %s3 = inlined_call_operand.hbm [shape: f32[32,128], index: 3, kind: input, shape index: {}]
  %s4 = inlined_call_operand.vmem [shape: f32[1,128], index: 4, kind: input, shape index: {}]
  %s5 = inlined_call_operand.vmem [shape: s32[8,1], index: 5, kind: input, shape index: {}]
  %s6 = inlined_call_operand.hbm [shape: f32[8,128], index: 6, kind: output, shape index: {0}]
  %s7 = inlined_call_operand.vmem [shape: f32[8,1], index: 7, kind: output, shape index: {1}]
  %8 = xla_tuple %s6, %s7
  %s9 = sld [smem:[#allocation0]]
  $region62: #{tpu_custom_call.1} parent=0
    _
  %s11 = ssub.s32 1, %s9
  %s12 = scalar_select 0, %s11, %s9
  $region1: #{tpu_custom_call.1} parent=0
    #allocation4 [shape = 'u8[131072]{0}', space=vmem, size = 0x20000, scoped, tag = 'input window, operand 0, single buffered']
    #allocation5 [shape = 's32[1]{0}', space=sflag, size = 0x4, scoped, tag = 'scoped memory for tpu_custom_call.1']
    #allocation6 [shape = 's32[1]{0}', space=sflag, size = 0x4, scoped, tag = 'scoped memory for tpu_custom_call.1']
    #allocation7 [shape = 'u8[16384]{0}', space=vmem, size = 0x4000, scoped, tag = 'input window, operand 3, single buffered']
    #allocation8 [shape = 's32[1]{0}', space=sflag, size = 0x4, scoped, tag = 'scoped memory for tpu_custom_call.1']
    #allocation9 [shape = 'u8[4096]{0}', space=vmem, size = 0x1000, scoped, tag = 'output window, operand 0, single buffered']
    %13 = vsyncpa [#allocation5], 0
    %14 = vsyncpa [#allocation8], 0
    %15 = vsyncpa [#allocation6], 0
    // Predicated region
    $region2: #{tpu_custom_call.1} parent=1 // pred_check
      _
    $region3: #{tpu_custom_call.1} parent=1 // pred_check_branch
      %17 = sbr.rel (0) target = $region5
    $region4: #{tpu_custom_call.1} parent=1 // pred_region
      %s19 = ssub.s32 4096, 4096
      %20 = vsyncadd [#allocation5], %s19
      %s21 = sshll.u32 [#allocation4], 4
      %s22 = int_to_ptr.vmem [resolvable:$true] %s21
      %27 = dma.hbm_to_vmem [thread:$0]  %s0, 4096, %s22, [#allocation5], 128, 128, 8
    $region5: #{tpu_custom_call.1} parent=1 // pred_fallthru
      _
    // Predicated region
    $region6: #{tpu_custom_call.1} parent=1 // pred_check
      _
    $region7: #{tpu_custom_call.1} parent=1 // pred_check_branch
      %29 = sbr.rel (0) target = $region9
    $region8: #{tpu_custom_call.1} parent=1 // pred_region
      _
    $region9: #{tpu_custom_call.1} parent=1 // pred_fallthru
      _
    // Predicated region
    $region10: #{tpu_custom_call.1} parent=1 // pred_check
      _
    $region11: #{tpu_custom_call.1} parent=1 // pred_check_branch
      %31 = sbr.rel (0) target = $region13
    $region12: #{tpu_custom_call.1} parent=1 // pred_region
      _
    $region13: #{tpu_custom_call.1} parent=1 // pred_fallthru
      _
    // Predicated region
    $region14: #{tpu_custom_call.1} parent=1 // pred_check
      _
    $region15: #{tpu_custom_call.1} parent=1 // pred_check_branch
      %33 = sbr.rel (0) target = $region17
    $region16: #{tpu_custom_call.1} parent=1 // pred_region
      %s35 = ssub.s32 512, 512
      %36 = vsyncadd [#allocation8], %s35
      %s37 = sshll.u32 [#allocation7], 4
      %s38 = int_to_ptr.vmem [resolvable:$true] %s37
      %43 = dma.hbm_to_vmem [thread:$0]  %s3, 512, %s38, [#allocation8], 128, 128, 8
    $region17: #{tpu_custom_call.1} parent=1 // pred_fallthru
      _
    // Predicated region
    $region18: #{tpu_custom_call.1} parent=1 // pred_check
      _
    $region19: #{tpu_custom_call.1} parent=1 // pred_check_branch
      %45 = sbr.rel (0) target = $region21
    $region20: #{tpu_custom_call.1} parent=1 // pred_region
      _
    $region21: #{tpu_custom_call.1} parent=1 // pred_fallthru
      _
    // Predicated region
    $region22: #{tpu_custom_call.1} parent=1 // pred_check
      _
    $region23: #{tpu_custom_call.1} parent=1 // pred_check_branch
      %47 = sbr.rel (0) target = $region25
    $region24: #{tpu_custom_call.1} parent=1 // pred_region
      _
    $region25: #{tpu_custom_call.1} parent=1 // pred_fallthru
      _
    // Predicated region
    $region26: #{tpu_custom_call.1} parent=1 // pred_check
      _
    $region27: #{tpu_custom_call.1} parent=1 // pred_check_branch
      %49 = sbr.rel (0) target = $region29
    $region28: #{tpu_custom_call.1} parent=1 // pred_region
      %50 = dma.done [#allocation5], 4096
    $region29: #{tpu_custom_call.1} parent=1 // pred_fallthru
      _
    // Predicated region
    $region30: #{tpu_custom_call.1} parent=1 // pred_check
      _
    $region31: #{tpu_custom_call.1} parent=1 // pred_check_branch
      %52 = sbr.rel (0) target = $region33
    $region32: #{tpu_custom_call.1} parent=1 // pred_region
      %53 = dma.done [#allocation8], 512
    $region33: #{tpu_custom_call.1} parent=1 // pred_fallthru
      _
    %v54 = vld [vmem:[#allocation4] sm:$0xff]
    %v55 = vld [vmem:[#allocation4 + $0x8] sm:$0xff]
    %v56 = vld [vmem:[#allocation4 + $0x10] sm:$0xff]
    %v57 = vld [vmem:[#allocation4 + $0x18] sm:$0xff]
    %v58 = vld [vmem:[#allocation4 + $0x20] sm:$0xff]
    %v59 = vld [vmem:[#allocation4 + $0x28] sm:$0xff]
    %v60 = vld [vmem:[#allocation4 + $0x30] sm:$0xff]
    %v61 = vld [vmem:[#allocation4 + $0x38] sm:$0xff]
    %v62 = vld [vmem:[#allocation4 + $0x40] sm:$0xff]
    %v63 = vld [vmem:[#allocation4 + $0x48] sm:$0xff]
    %v64 = vld [vmem:[#allocation4 + $0x50] sm:$0xff]
    %v65 = vld [vmem:[#allocation4 + $0x58] sm:$0xff]
    %v66 = vld [vmem:[#allocation4 + $0x60] sm:$0xff]
    %v67 = vld [vmem:[#allocation4 + $0x68] sm:$0xff]
    %v68 = vld [vmem:[#allocation4 + $0x70] sm:$0xff]
    %v69 = vld [vmem:[#allocation4 + $0x78] sm:$0xff]
    %v70 = vld [vmem:[#allocation4 + $0x80] sm:$0xff]
    %v71 = vld [vmem:[#allocation4 + $0x88] sm:$0xff]
    %v72 = vld [vmem:[#allocation4 + $0x90] sm:$0xff]
    %v73 = vld [vmem:[#allocation4 + $0x98] sm:$0xff]
    %v74 = vld [vmem:[#allocation4 + $0xa0] sm:$0xff]
    %v75 = vld [vmem:[#allocation4 + $0xa8] sm:$0xff]
    %v76 = vld [vmem:[#allocation4 + $0xb0] sm:$0xff]
    %v77 = vld [vmem:[#allocation4 + $0xb8] sm:$0xff]
    %v78 = vld [vmem:[#allocation4 + $0xc0] sm:$0xff]
    %v79 = vld [vmem:[#allocation4 + $0xc8] sm:$0xff]
    %v80 = vld [vmem:[#allocation4 + $0xd0] sm:$0xff]
    %v81 = vld [vmem:[#allocation4 + $0xd8] sm:$0xff]
    %v82 = vld [vmem:[#allocation4 + $0xe0] sm:$0xff]
    %v83 = vld [vmem:[#allocation4 + $0xe8] sm:$0xff]
    %v84 = vld [vmem:[#allocation4 + $0xf0] sm:$0xff]
    %v85 = vld [vmem:[#allocation4 + $0xf8] sm:$0xff]
    %vm86 = vcmask 523264
    %v87 = vsel %vm86, %v54, -inf
    %88 = vmax.xlane.f32.xlu0 %v87
    %v89 = vpop.xlane.xlu0 %88
    %v90 = vsel %vm86, %v55, -inf
    %91 = vmax.xlane.f32.xlu0 %v90
    %v92 = vpop.xlane.xlu0 %91
    %v93 = vsel %vm86, %v56, -inf
    %94 = vmax.xlane.f32.xlu0 %v93
    %v95 = vpop.xlane.xlu0 %94
    %v96 = vsel %vm86, %v57, -inf
    %97 = vmax.xlane.f32.xlu0 %v96
    %v98 = vpop.xlane.xlu0 %97
    %v99 = vsel %vm86, %v58, -inf
    %100 = vmax.xlane.f32.xlu0 %v99
    %v101 = vpop.xlane.xlu0 %100
    %v102 = vsel %vm86, %v59, -inf
    %103 = vmax.xlane.f32.xlu0 %v102
    %v104 = vpop.xlane.xlu0 %103
    %v105 = vsel %vm86, %v60, -inf
    %106 = vmax.xlane.f32.xlu0 %v105
    %v107 = vpop.xlane.xlu0 %106
    %v108 = vsel %vm86, %v61, -inf
    %109 = vmax.xlane.f32.xlu0 %v108
    %v110 = vpop.xlane.xlu0 %109
    %v111 = vsel %vm86, %v62, -inf
    %112 = vmax.xlane.f32.xlu0 %v111
    %v113 = vpop.xlane.xlu0 %112
    %v114 = vsel %vm86, %v63, -inf
    %115 = vmax.xlane.f32.xlu0 %v114
    %v116 = vpop.xlane.xlu0 %115
    %v117 = vsel %vm86, %v64, -inf
    %118 = vmax.xlane.f32.xlu0 %v117
    %v119 = vpop.xlane.xlu0 %118
    %v120 = vsel %vm86, %v65, -inf
    %121 = vmax.xlane.f32.xlu0 %v120
    %v122 = vpop.xlane.xlu0 %121
    %v123 = vsel %vm86, %v66, -inf
    %124 = vmax.xlane.f32.xlu0 %v123
    %v125 = vpop.xlane.xlu0 %124
    %v126 = vsel %vm86, %v67, -inf
    %127 = vmax.xlane.f32.xlu0 %v126
    %v128 = vpop.xlane.xlu0 %127
    %v129 = vsel %vm86, %v68, -inf
    %130 = vmax.xlane.f32.xlu0 %v129
    %v131 = vpop.xlane.xlu0 %130
    %v132 = vsel %vm86, %v69, -inf
    %133 = vmax.xlane.f32.xlu0 %v132
    %v134 = vpop.xlane.xlu0 %133
    %v135 = vsel %vm86, %v70, -inf
    %136 = vmax.xlane.f32.xlu0 %v135
    %v137 = vpop.xlane.xlu0 %136
    %v138 = vsel %vm86, %v71, -inf
    %139 = vmax.xlane.f32.xlu0 %v138
    %v140 = vpop.xlane.xlu0 %139
    %v141 = vsel %vm86, %v72, -inf
    %142 = vmax.xlane.f32.xlu0 %v141
    %v143 = vpop.xlane.xlu0 %142
    %v144 = vsel %vm86, %v73, -inf
    %145 = vmax.xlane.f32.xlu0 %v144
    %v146 = vpop.xlane.xlu0 %145
    %v147 = vsel %vm86, %v74, -inf
    %148 = vmax.xlane.f32.xlu0 %v147
    %v149 = vpop.xlane.xlu0 %148
    %v150 = vsel %vm86, %v75, -inf
    %151 = vmax.xlane.f32.xlu0 %v150
    %v152 = vpop.xlane.xlu0 %151
    %v153 = vsel %vm86, %v76, -inf
    %154 = vmax.xlane.f32.xlu0 %v153
    %v155 = vpop.xlane.xlu0 %154
    %v156 = vsel %vm86, %v77, -inf
    %157 = vmax.xlane.f32.xlu0 %v156
    %v158 = vpop.xlane.xlu0 %157
    %v159 = vsel %vm86, %v78, -inf
    %160 = vmax.xlane.f32.xlu0 %v159
    %v161 = vpop.xlane.xlu0 %160
    %v162 = vsel %vm86, %v79, -inf
    %163 = vmax.xlane.f32.xlu0 %v162
    %v164 = vpop.xlane.xlu0 %163
    %v165 = vsel %vm86, %v80, -inf
    %166 = vmax.xlane.f32.xlu0 %v165
    %v167 = vpop.xlane.xlu0 %166
    %v168 = vsel %vm86, %v81, -inf
    %169 = vmax.xlane.f32.xlu0 %v168
    %v170 = vpop.xlane.xlu0 %169
    %v171 = vsel %vm86, %v82, -inf
    %172 = vmax.xlane.f32.xlu0 %v171
    %v173 = vpop.xlane.xlu0 %172
    %v174 = vsel %vm86, %v83, -inf
    %175 = vmax.xlane.f32.xlu0 %v174
    %v176 = vpop.xlane.xlu0 %175
    %v177 = vsel %vm86, %v84, -inf
    %178 = vmax.xlane.f32.xlu0 %v177
    %v179 = vpop.xlane.xlu0 %178
    %v180 = vsel %vm86, %v85, -inf
    %181 = vmax.xlane.f32.xlu0 %v180
    %v182 = vpop.xlane.xlu0 %181
    %v183 = vsel %vm86, %v54, inf
    %184 = vmin.xlane.f32.xlu0 %v183
    %v185 = vpop.xlane.xlu0 %184
    %v186 = vsel %vm86, %v55, inf
    %187 = vmin.xlane.f32.xlu0 %v186
    %v188 = vpop.xlane.xlu0 %187
    %v189 = vsel %vm86, %v56, inf
    %190 = vmin.xlane.f32.xlu0 %v189
    %v191 = vpop.xlane.xlu0 %190
    %v192 = vsel %vm86, %v57, inf
    %193 = vmin.xlane.f32.xlu0 %v192
    %v194 = vpop.xlane.xlu0 %193
    %v195 = vsel %vm86, %v58, inf
    %196 = vmin.xlane.f32.xlu0 %v195
    %v197 = vpop.xlane.xlu0 %196
    %v198 = vsel %vm86, %v59, inf
    %199 = vmin.xlane.f32.xlu0 %v198
    %v200 = vpop.xlane.xlu0 %199
    %v201 = vsel %vm86, %v60, inf
    %202 = vmin.xlane.f32.xlu0 %v201
    %v203 = vpop.xlane.xlu0 %202
    %v204 = vsel %vm86, %v61, inf
    %205 = vmin.xlane.f32.xlu0 %v204
    %v206 = vpop.xlane.xlu0 %205
    %v207 = vsel %vm86, %v62, inf
    %208 = vmin.xlane.f32.xlu0 %v207
    %v209 = vpop.xlane.xlu0 %208
    %v210 = vsel %vm86, %v63, inf
    %211 = vmin.xlane.f32.xlu0 %v210
    %v212 = vpop.xlane.xlu0 %211
    %v213 = vsel %vm86, %v64, inf
    %214 = vmin.xlane.f32.xlu0 %v213
    %v215 = vpop.xlane.xlu0 %214
    %v216 = vsel %vm86, %v65, inf
    %217 = vmin.xlane.f32.xlu0 %v216
    %v218 = vpop.xlane.xlu0 %217
    %v219 = vsel %vm86, %v66, inf
    %220 = vmin.xlane.f32.xlu0 %v219
    %v221 = vpop.xlane.xlu0 %220
    %v222 = vsel %vm86, %v67, inf
    %223 = vmin.xlane.f32.xlu0 %v222
    %v224 = vpop.xlane.xlu0 %223
    %v225 = vsel %vm86, %v68, inf
    %226 = vmin.xlane.f32.xlu0 %v225
    %v227 = vpop.xlane.xlu0 %226
    %v228 = vsel %vm86, %v69, inf
    %229 = vmin.xlane.f32.xlu0 %v228
    %v230 = vpop.xlane.xlu0 %229
    %v231 = vsel %vm86, %v70, inf
    %232 = vmin.xlane.f32.xlu0 %v231
    %v233 = vpop.xlane.xlu0 %232
    %v234 = vsel %vm86, %v71, inf
    %235 = vmin.xlane.f32.xlu0 %v234
    %v236 = vpop.xlane.xlu0 %235
    %v237 = vsel %vm86, %v72, inf
    %238 = vmin.xlane.f32.xlu0 %v237
    %v239 = vpop.xlane.xlu0 %238
    %v240 = vsel %vm86, %v73, inf
    %241 = vmin.xlane.f32.xlu0 %v240
    %v242 = vpop.xlane.xlu0 %241
    %v243 = vsel %vm86, %v74, inf
    %244 = vmin.xlane.f32.xlu0 %v243
    %v245 = vpop.xlane.xlu0 %244
    %v246 = vsel %vm86, %v75, inf
    %247 = vmin.xlane.f32.xlu0 %v246
    %v248 = vpop.xlane.xlu0 %247
    %v249 = vsel %vm86, %v76, inf
    %250 = vmin.xlane.f32.xlu0 %v249
    %v251 = vpop.xlane.xlu0 %250
    %v252 = vsel %vm86, %v77, inf
    %253 = vmin.xlane.f32.xlu0 %v252
    %v254 = vpop.xlane.xlu0 %253
    %v255 = vsel %vm86, %v78, inf
    %256 = vmin.xlane.f32.xlu0 %v255
    %v257 = vpop.xlane.xlu0 %256
    %v258 = vsel %vm86, %v79, inf
    %259 = vmin.xlane.f32.xlu0 %v258
    %v260 = vpop.xlane.xlu0 %259
    %v261 = vsel %vm86, %v80, inf
    %262 = vmin.xlane.f32.xlu0 %v261
    %v263 = vpop.xlane.xlu0 %262
    %v264 = vsel %vm86, %v81, inf
    %265 = vmin.xlane.f32.xlu0 %v264
    %v266 = vpop.xlane.xlu0 %265
    %v267 = vsel %vm86, %v82, inf
    %268 = vmin.xlane.f32.xlu0 %v267
    %v269 = vpop.xlane.xlu0 %268
    %v270 = vsel %vm86, %v83, inf
    %271 = vmin.xlane.f32.xlu0 %v270
    %v272 = vpop.xlane.xlu0 %271
    %v273 = vsel %vm86, %v84, inf
    %274 = vmin.xlane.f32.xlu0 %v273
    %v275 = vpop.xlane.xlu0 %274
    %v276 = vsel %vm86, %v85, inf
    %277 = vmin.xlane.f32.xlu0 %v276
    %v278 = vpop.xlane.xlu0 %277
    %p279 = scmp.eq.s32.totalorder 0, 0
    // Predicated region
    $region34: #{tpu_custom_call.1} parent=1 // pred_check
      %p280 = pneg %p279
    $region35: #{tpu_custom_call.1} parent=1 // pred_check_branch
      %282 = sbr.rel (%p280) target = $region37
    $region36: #{tpu_custom_call.1} parent=1 // pred_region
      %v315 = vlaneseq
      %v316 = vand.u32 %v315, 127
      %v317 = vlaneseq
      %v318 = vshrl.u32 %v317, 7
      %v319 = vsub.s32 %v316, %v318
      %v320 = vrot.slane %v89, %v319
      %v321 = vadd.s32 %v316, 4294967288
      %v322 = vlaneseq
      %v323 = vshrl.u32 %v322, 7
      %v324 = vsub.s32 %v321, %v323
      %v325 = vrot.slane %v92, %v324
      %vm326 = vcmask 130112
      %v327 = vsel %vm326, %v325, %v320
      %v328 = vadd.s32 %v316, 4294967280
      %v329 = vlaneseq
      %v330 = vshrl.u32 %v329, 7
      %v331 = vsub.s32 %v328, %v330
      %v332 = vrot.slane %v95, %v331
      %vm333 = vcmask 195712
      %v334 = vsel %vm333, %v332, %v327
      %v335 = vadd.s32 %v316, 4294967272
      %v336 = vlaneseq
      %v337 = vshrl.u32 %v336, 7
      %v338 = vsub.s32 %v335, %v337
      %v339 = vrot.slane %v98, %v338
      %vm340 = vcmask 261312
      %v341 = vsel %vm340, %v339, %v334
      %v342 = vlaneseq
      %v343 = vshrl.u32 %v342, 7
      %v344 = vsub.s32 %v316, %v343
      %v345 = vrot.slane %v101, %v344
      %v346 = vlaneseq
      %v347 = vshrl.u32 %v346, 7
      %v348 = vsub.s32 %v321, %v347
      %v349 = vrot.slane %v104, %v348
      %v350 = vsel %vm326, %v349, %v345
      %v351 = vlaneseq
      %v352 = vshrl.u32 %v351, 7
      %v353 = vsub.s32 %v328, %v352
      %v354 = vrot.slane %v107, %v353
      %v355 = vsel %vm333, %v354, %v350
      %v356 = vlaneseq
      %v357 = vshrl.u32 %v356, 7
      %v358 = vsub.s32 %v335, %v357
      %v359 = vrot.slane %v110, %v358
      %v360 = vsel %vm340, %v359, %v355
      %v361 = vlaneseq
      %v362 = vshrl.u32 %v361, 7
      %v363 = vsub.s32 %v316, %v362
      %v364 = vrot.slane %v113, %v363
      %v365 = vlaneseq
      %v366 = vshrl.u32 %v365, 7
      %v367 = vsub.s32 %v321, %v366
      %v368 = vrot.slane %v116, %v367
      %v369 = vsel %vm326, %v368, %v364
      %v370 = vlaneseq
      %v371 = vshrl.u32 %v370, 7
      %v372 = vsub.s32 %v328, %v371
      %v373 = vrot.slane %v119, %v372
      %v374 = vsel %vm333, %v373, %v369
      %v375 = vlaneseq
      %v376 = vshrl.u32 %v375, 7
      %v377 = vsub.s32 %v335, %v376
      %v378 = vrot.slane %v122, %v377
      %v379 = vsel %vm340, %v378, %v374
      %v380 = vlaneseq
      %v381 = vshrl.u32 %v380, 7
      %v382 = vsub.s32 %v316, %v381
      %v383 = vrot.slane %v125, %v382
      %v384 = vlaneseq
      %v385 = vshrl.u32 %v384, 7
      %v386 = vsub.s32 %v321, %v385
      %v387 = vrot.slane %v128, %v386
      %v388 = vsel %vm326, %v387, %v383
      %v389 = vlaneseq
      %v390 = vshrl.u32 %v389, 7
      %v391 = vsub.s32 %v328, %v390
      %v392 = vrot.slane %v131, %v391
      %v393 = vsel %vm333, %v392, %v388
      %v394 = vlaneseq
      %v395 = vshrl.u32 %v394, 7
      %v396 = vsub.s32 %v335, %v395
      %v397 = vrot.slane %v134, %v396
      %v398 = vsel %vm340, %v397, %v393
      %v399 = vlaneseq
      %v400 = vshrl.u32 %v399, 7
      %v401 = vsub.s32 %v316, %v400
      %v402 = vrot.slane %v137, %v401
      %v403 = vlaneseq
      %v404 = vshrl.u32 %v403, 7
      %v405 = vsub.s32 %v321, %v404
      %v406 = vrot.slane %v140, %v405
      %v407 = vsel %vm326, %v406, %v402
      %v408 = vlaneseq
      %v409 = vshrl.u32 %v408, 7
      %v410 = vsub.s32 %v328, %v409
      %v411 = vrot.slane %v143, %v410
      %v412 = vsel %vm333, %v411, %v407
      %v413 = vlaneseq
      %v414 = vshrl.u32 %v413, 7
      %v415 = vsub.s32 %v335, %v414
      %v416 = vrot.slane %v146, %v415
      %v417 = vsel %vm340, %v416, %v412
      %v418 = vlaneseq
      %v419 = vshrl.u32 %v418, 7
      %v420 = vsub.s32 %v316, %v419
      %v421 = vrot.slane %v149, %v420
      %v422 = vlaneseq
      %v423 = vshrl.u32 %v422, 7
      %v424 = vsub.s32 %v321, %v423
      %v425 = vrot.slane %v152, %v424
      %v426 = vsel %vm326, %v425, %v421
      %v427 = vlaneseq
      %v428 = vshrl.u32 %v427, 7
      %v429 = vsub.s32 %v328, %v428
      %v430 = vrot.slane %v155, %v429
      %v431 = vsel %vm333, %v430, %v426
      %v432 = vlaneseq
      %v433 = vshrl.u32 %v432, 7
      %v434 = vsub.s32 %v335, %v433
      %v435 = vrot.slane %v158, %v434
      %v436 = vsel %vm340, %v435, %v431
      %v437 = vlaneseq
      %v438 = vshrl.u32 %v437, 7
      %v439 = vsub.s32 %v316, %v438
      %v440 = vrot.slane %v161, %v439
      %v441 = vlaneseq
      %v442 = vshrl.u32 %v441, 7
      %v443 = vsub.s32 %v321, %v442
      %v444 = vrot.slane %v164, %v443
      %v445 = vsel %vm326, %v444, %v440
      %v446 = vlaneseq
      %v447 = vshrl.u32 %v446, 7
      %v448 = vsub.s32 %v328, %v447
      %v449 = vrot.slane %v167, %v448
      %v450 = vsel %vm333, %v449, %v445
      %v451 = vlaneseq
      %v452 = vshrl.u32 %v451, 7
      %v453 = vsub.s32 %v335, %v452
      %v454 = vrot.slane %v170, %v453
      %v455 = vsel %vm340, %v454, %v450
      %v456 = vlaneseq
      %v457 = vshrl.u32 %v456, 7
      %v458 = vsub.s32 %v316, %v457
      %v459 = vrot.slane %v173, %v458
      %v460 = vlaneseq
      %v461 = vshrl.u32 %v460, 7
      %v462 = vsub.s32 %v321, %v461
      %v463 = vrot.slane %v176, %v462
      %v464 = vsel %vm326, %v463, %v459
      %v465 = vlaneseq
      %v466 = vshrl.u32 %v465, 7
      %v467 = vsub.s32 %v328, %v466
      %v468 = vrot.slane %v179, %v467
      %v469 = vsel %vm333, %v468, %v464
      %v470 = vlaneseq
      %v471 = vshrl.u32 %v470, 7
      %v472 = vsub.s32 %v335, %v471
      %v473 = vrot.slane %v182, %v472
      %v474 = vsel %vm340, %v473, %v469
      %vm475 = vcmask 1041409
      %v476 = vsel %vm475, %v360, %v341
      %vm477 = vcmask 1042434
      %v478 = vsel %vm477, %v379, %v476
      %vm479 = vcmask 1043459
      %v480 = vsel %vm479, %v398, %v478
      %vm481 = vcmask 1044484
      %v482 = vsel %vm481, %v417, %v480
      %vm483 = vcmask 1045509
      %v484 = vsel %vm483, %v436, %v482
      %vm485 = vcmask 1046534
      %v486 = vsel %vm485, %v455, %v484
      %vm487 = vcmask 1047559
      %v488 = vsel %vm487, %v474, %v486
      %vm490 = vcmask 261120
      %491 = vst.msk [vmem:[#allocation2] sm:$0xff] %vm490, %v488
      %v524 = vlaneseq
      %v525 = vshrl.u32 %v524, 7
      %v526 = vsub.s32 %v316, %v525
      %v527 = vrot.slane %v185, %v526
      %v528 = vlaneseq
      %v529 = vshrl.u32 %v528, 7
      %v530 = vsub.s32 %v321, %v529
      %v531 = vrot.slane %v188, %v530
      %v532 = vsel %vm326, %v531, %v527
      %v533 = vlaneseq
      %v534 = vshrl.u32 %v533, 7
      %v535 = vsub.s32 %v328, %v534
      %v536 = vrot.slane %v191, %v535
      %v537 = vsel %vm333, %v536, %v532
      %v538 = vlaneseq
      %v539 = vshrl.u32 %v538, 7
      %v540 = vsub.s32 %v335, %v539
      %v541 = vrot.slane %v194, %v540
      %v542 = vsel %vm340, %v541, %v537
      %v543 = vlaneseq
      %v544 = vshrl.u32 %v543, 7
      %v545 = vsub.s32 %v316, %v544
      %v546 = vrot.slane %v197, %v545
      %v547 = vlaneseq
      %v548 = vshrl.u32 %v547, 7
      %v549 = vsub.s32 %v321, %v548
      %v550 = vrot.slane %v200, %v549
      %v551 = vsel %vm326, %v550, %v546
      %v552 = vlaneseq
      %v553 = vshrl.u32 %v552, 7
      %v554 = vsub.s32 %v328, %v553
      %v555 = vrot.slane %v203, %v554
      %v556 = vsel %vm333, %v555, %v551
      %v557 = vlaneseq
      %v558 = vshrl.u32 %v557, 7
      %v559 = vsub.s32 %v335, %v558
      %v560 = vrot.slane %v206, %v559
      %v561 = vsel %vm340, %v560, %v556
      %v562 = vlaneseq
      %v563 = vshrl.u32 %v562, 7
      %v564 = vsub.s32 %v316, %v563
      %v565 = vrot.slane %v209, %v564
      %v566 = vlaneseq
      %v567 = vshrl.u32 %v566, 7
      %v568 = vsub.s32 %v321, %v567
      %v569 = vrot.slane %v212, %v568
      %v570 = vsel %vm326, %v569, %v565
      %v571 = vlaneseq
      %v572 = vshrl.u32 %v571, 7
      %v573 = vsub.s32 %v328, %v572
      %v574 = vrot.slane %v215, %v573
      %v575 = vsel %vm333, %v574, %v570
      %v576 = vlaneseq
      %v577 = vshrl.u32 %v576, 7
      %v578 = vsub.s32 %v335, %v577
      %v579 = vrot.slane %v218, %v578
      %v580 = vsel %vm340, %v579, %v575
      %v581 = vlaneseq
      %v582 = vshrl.u32 %v581, 7
      %v583 = vsub.s32 %v316, %v582
      %v584 = vrot.slane %v221, %v583
      %v585 = vlaneseq
      %v586 = vshrl.u32 %v585, 7
      %v587 = vsub.s32 %v321, %v586
      %v588 = vrot.slane %v224, %v587
      %v589 = vsel %vm326, %v588, %v584
      %v590 = vlaneseq
      %v591 = vshrl.u32 %v590, 7
      %v592 = vsub.s32 %v328, %v591
      %v593 = vrot.slane %v227, %v592
      %v594 = vsel %vm333, %v593, %v589
      %v595 = vlaneseq
      %v596 = vshrl.u32 %v595, 7
      %v597 = vsub.s32 %v335, %v596
      %v598 = vrot.slane %v230, %v597
      %v599 = vsel %vm340, %v598, %v594
      %v600 = vlaneseq
      %v601 = vshrl.u32 %v600, 7
      %v602 = vsub.s32 %v316, %v601
      %v603 = vrot.slane %v233, %v602
      %v604 = vlaneseq
      %v605 = vshrl.u32 %v604, 7
      %v606 = vsub.s32 %v321, %v605
      %v607 = vrot.slane %v236, %v606
      %v608 = vsel %vm326, %v607, %v603
      %v609 = vlaneseq
      %v610 = vshrl.u32 %v609, 7
      %v611 = vsub.s32 %v328, %v610
      %v612 = vrot.slane %v239, %v611
      %v613 = vsel %vm333, %v612, %v608
      %v614 = vlaneseq
      %v615 = vshrl.u32 %v614, 7
      %v616 = vsub.s32 %v335, %v615
      %v617 = vrot.slane %v242, %v616
      %v618 = vsel %vm340, %v617, %v613
      %v619 = vlaneseq
      %v620 = vshrl.u32 %v619, 7
      %v621 = vsub.s32 %v316, %v620
      %v622 = vrot.slane %v245, %v621
      %v623 = vlaneseq
      %v624 = vshrl.u32 %v623, 7
      %v625 = vsub.s32 %v321, %v624
      %v626 = vrot.slane %v248, %v625
      %v627 = vsel %vm326, %v626, %v622
      %v628 = vlaneseq
      %v629 = vshrl.u32 %v628, 7
      %v630 = vsub.s32 %v328, %v629
      %v631 = vrot.slane %v251, %v630
      %v632 = vsel %vm333, %v631, %v627
      %v633 = vlaneseq
      %v634 = vshrl.u32 %v633, 7
      %v635 = vsub.s32 %v335, %v634
      %v636 = vrot.slane %v254, %v635
      %v637 = vsel %vm340, %v636, %v632
      %v638 = vlaneseq
      %v639 = vshrl.u32 %v638, 7
      %v640 = vsub.s32 %v316, %v639
      %v641 = vrot.slane %v257, %v640
      %v642 = vlaneseq
      %v643 = vshrl.u32 %v642, 7
      %v644 = vsub.s32 %v321, %v643
      %v645 = vrot.slane %v260, %v644
      %v646 = vsel %vm326, %v645, %v641
      %v647 = vlaneseq
      %v648 = vshrl.u32 %v647, 7
      %v649 = vsub.s32 %v328, %v648
      %v650 = vrot.slane %v263, %v649
      %v651 = vsel %vm333, %v650, %v646
      %v652 = vlaneseq
      %v653 = vshrl.u32 %v652, 7
      %v654 = vsub.s32 %v335, %v653
      %v655 = vrot.slane %v266, %v654
      %v656 = vsel %vm340, %v655, %v651
      %v657 = vlaneseq
      %v658 = vshrl.u32 %v657, 7
      %v659 = vsub.s32 %v316, %v658
      %v660 = vrot.slane %v269, %v659
      %v661 = vlaneseq
      %v662 = vshrl.u32 %v661, 7
      %v663 = vsub.s32 %v321, %v662
      %v664 = vrot.slane %v272, %v663
      %v665 = vsel %vm326, %v664, %v660
      %v666 = vlaneseq
      %v667 = vshrl.u32 %v666, 7
      %v668 = vsub.s32 %v328, %v667
      %v669 = vrot.slane %v275, %v668
      %v670 = vsel %vm333, %v669, %v665
      %v671 = vlaneseq
      %v672 = vshrl.u32 %v671, 7
      %v673 = vsub.s32 %v335, %v672
      %v674 = vrot.slane %v278, %v673
      %v675 = vsel %vm340, %v674, %v670
      %v676 = vsel %vm475, %v561, %v542
      %v677 = vsel %vm477, %v580, %v676
      %v678 = vsel %vm479, %v599, %v677
      %v679 = vsel %vm481, %v618, %v678
      %v680 = vsel %vm483, %v637, %v679
      %v681 = vsel %vm485, %v656, %v680
      %v682 = vsel %vm487, %v675, %v681
      %684 = vst.msk [vmem:[#allocation3] sm:$0xff] %vm490, %v682
    $region37: #{tpu_custom_call.1} parent=1 // pred_fallthru
      _
    %p685 = scmp.gt.s32.totalorder 0, 0
    // Predicated region
    $region38: #{tpu_custom_call.1} parent=1 // pred_check
      %p686 = pneg %p685
    $region39: #{tpu_custom_call.1} parent=1 // pred_check_branch
      %688 = sbr.rel (%p686) target = $region41
    $region40: #{tpu_custom_call.1} parent=1 // pred_region
      %v689 = vld [vmem:[#allocation2] sm:$0xff]
      %v722 = vlaneseq
      %v723 = vand.u32 %v722, 127
      %v724 = vlaneseq
      %v725 = vshrl.u32 %v724, 7
      %v726 = vsub.s32 %v723, %v725
      %v727 = vrot.slane %v89, %v726
      %v728 = vadd.s32 %v723, 4294967288
      %v729 = vlaneseq
      %v730 = vshrl.u32 %v729, 7
      %v731 = vsub.s32 %v728, %v730
      %v732 = vrot.slane %v92, %v731
      %vm733 = vcmask 130112
      %v734 = vsel %vm733, %v732, %v727
      %v735 = vadd.s32 %v723, 4294967280
      %v736 = vlaneseq
      %v737 = vshrl.u32 %v736, 7
      %v738 = vsub.s32 %v735, %v737
      %v739 = vrot.slane %v95, %v738
      %vm740 = vcmask 195712
      %v741 = vsel %vm740, %v739, %v734
      %v742 = vadd.s32 %v723, 4294967272
      %v743 = vlaneseq
      %v744 = vshrl.u32 %v743, 7
      %v745 = vsub.s32 %v742, %v744
      %v746 = vrot.slane %v98, %v745
      %vm747 = vcmask 261312
      %v748 = vsel %vm747, %v746, %v741
      %v749 = vlaneseq
      %v750 = vshrl.u32 %v749, 7
      %v751 = vsub.s32 %v723, %v750
      %v752 = vrot.slane %v101, %v751
      %v753 = vlaneseq
      %v754 = vshrl.u32 %v753, 7
      %v755 = vsub.s32 %v728, %v754
      %v756 = vrot.slane %v104, %v755
      %v757 = vsel %vm733, %v756, %v752
      %v758 = vlaneseq
      %v759 = vshrl.u32 %v758, 7
      %v760 = vsub.s32 %v735, %v759
      %v761 = vrot.slane %v107, %v760
      %v762 = vsel %vm740, %v761, %v757
      %v763 = vlaneseq
      %v764 = vshrl.u32 %v763, 7
      %v765 = vsub.s32 %v742, %v764
      %v766 = vrot.slane %v110, %v765
      %v767 = vsel %vm747, %v766, %v762
      %v768 = vlaneseq
      %v769 = vshrl.u32 %v768, 7
      %v770 = vsub.s32 %v723, %v769
      %v771 = vrot.slane %v113, %v770
      %v772 = vlaneseq
      %v773 = vshrl.u32 %v772, 7
      %v774 = vsub.s32 %v728, %v773
      %v775 = vrot.slane %v116, %v774
      %v776 = vsel %vm733, %v775, %v771
      %v777 = vlaneseq
      %v778 = vshrl.u32 %v777, 7
      %v779 = vsub.s32 %v735, %v778
      %v780 = vrot.slane %v119, %v779
      %v781 = vsel %vm740, %v780, %v776
      %v782 = vlaneseq
      %v783 = vshrl.u32 %v782, 7
      %v784 = vsub.s32 %v742, %v783
      %v785 = vrot.slane %v122, %v784
      %v786 = vsel %vm747, %v785, %v781
      %v787 = vlaneseq
      %v788 = vshrl.u32 %v787, 7
      %v789 = vsub.s32 %v723, %v788
      %v790 = vrot.slane %v125, %v789
      %v791 = vlaneseq
      %v792 = vshrl.u32 %v791, 7
      %v793 = vsub.s32 %v728, %v792
      %v794 = vrot.slane %v128, %v793
      %v795 = vsel %vm733, %v794, %v790
      %v796 = vlaneseq
      %v797 = vshrl.u32 %v796, 7
      %v798 = vsub.s32 %v735, %v797
      %v799 = vrot.slane %v131, %v798
      %v800 = vsel %vm740, %v799, %v795
      %v801 = vlaneseq
      %v802 = vshrl.u32 %v801, 7
      %v803 = vsub.s32 %v742, %v802
      %v804 = vrot.slane %v134, %v803
      %v805 = vsel %vm747, %v804, %v800
      %v806 = vlaneseq
      %v807 = vshrl.u32 %v806, 7
      %v808 = vsub.s32 %v723, %v807
      %v809 = vrot.slane %v137, %v808
      %v810 = vlaneseq
      %v811 = vshrl.u32 %v810, 7
      %v812 = vsub.s32 %v728, %v811
      %v813 = vrot.slane %v140, %v812
      %v814 = vsel %vm733, %v813, %v809
      %v815 = vlaneseq
      %v816 = vshrl.u32 %v815, 7
      %v817 = vsub.s32 %v735, %v816
      %v818 = vrot.slane %v143, %v817
      %v819 = vsel %vm740, %v818, %v814
      %v820 = vlaneseq
      %v821 = vshrl.u32 %v820, 7
      %v822 = vsub.s32 %v742, %v821
      %v823 = vrot.slane %v146, %v822
      %v824 = vsel %vm747, %v823, %v819
      %v825 = vlaneseq
      %v826 = vshrl.u32 %v825, 7
      %v827 = vsub.s32 %v723, %v826
      %v828 = vrot.slane %v149, %v827
      %v829 = vlaneseq
      %v830 = vshrl.u32 %v829, 7
      %v831 = vsub.s32 %v728, %v830
      %v832 = vrot.slane %v152, %v831
      %v833 = vsel %vm733, %v832, %v828
      %v834 = vlaneseq
      %v835 = vshrl.u32 %v834, 7
      %v836 = vsub.s32 %v735, %v835
      %v837 = vrot.slane %v155, %v836
      %v838 = vsel %vm740, %v837, %v833
      %v839 = vlaneseq
      %v840 = vshrl.u32 %v839, 7
      %v841 = vsub.s32 %v742, %v840
      %v842 = vrot.slane %v158, %v841
      %v843 = vsel %vm747, %v842, %v838
      %v844 = vlaneseq
      %v845 = vshrl.u32 %v844, 7
      %v846 = vsub.s32 %v723, %v845
      %v847 = vrot.slane %v161, %v846
      %v848 = vlaneseq
      %v849 = vshrl.u32 %v848, 7
      %v850 = vsub.s32 %v728, %v849
      %v851 = vrot.slane %v164, %v850
      %v852 = vsel %vm733, %v851, %v847
      %v853 = vlaneseq
      %v854 = vshrl.u32 %v853, 7
      %v855 = vsub.s32 %v735, %v854
      %v856 = vrot.slane %v167, %v855
      %v857 = vsel %vm740, %v856, %v852
      %v858 = vlaneseq
      %v859 = vshrl.u32 %v858, 7
      %v860 = vsub.s32 %v742, %v859
      %v861 = vrot.slane %v170, %v860
      %v862 = vsel %vm747, %v861, %v857
      %v863 = vlaneseq
      %v864 = vshrl.u32 %v863, 7
      %v865 = vsub.s32 %v723, %v864
      %v866 = vrot.slane %v173, %v865
      %v867 = vlaneseq
      %v868 = vshrl.u32 %v867, 7
      %v869 = vsub.s32 %v728, %v868
      %v870 = vrot.slane %v176, %v869
      %v871 = vsel %vm733, %v870, %v866
      %v872 = vlaneseq
      %v873 = vshrl.u32 %v872, 7
      %v874 = vsub.s32 %v735, %v873
      %v875 = vrot.slane %v179, %v874
      %v876 = vsel %vm740, %v875, %v871
      %v877 = vlaneseq
      %v878 = vshrl.u32 %v877, 7
      %v879 = vsub.s32 %v742, %v878
      %v880 = vrot.slane %v182, %v879
      %v881 = vsel %vm747, %v880, %v876
      %vm882 = vcmask 1041409
      %v883 = vsel %vm882, %v767, %v748
      %vm884 = vcmask 1042434
      %v885 = vsel %vm884, %v786, %v883
      %vm886 = vcmask 1043459
      %v887 = vsel %vm886, %v805, %v885
      %vm888 = vcmask 1044484
      %v889 = vsel %vm888, %v824, %v887
      %vm890 = vcmask 1045509
      %v891 = vsel %vm890, %v843, %v889
      %vm892 = vcmask 1046534
      %v893 = vsel %vm892, %v862, %v891
      %vm894 = vcmask 1047559
      %v895 = vsel %vm894, %v881, %v893
      %v897 = vmax.f32 %v689, %v895
      %vm898 = vcmask 261120
      %899 = vst.msk [vmem:[#allocation2] sm:$0xff] %vm898, %v897
      %v900 = vld [vmem:[#allocation3] sm:$0xff]
      %v933 = vlaneseq
      %v934 = vshrl.u32 %v933, 7
      %v935 = vsub.s32 %v723, %v934
      %v936 = vrot.slane %v185, %v935
      %v937 = vlaneseq
      %v938 = vshrl.u32 %v937, 7
      %v939 = vsub.s32 %v728, %v938
      %v940 = vrot.slane %v188, %v939
      %v941 = vsel %vm733, %v940, %v936
      %v942 = vlaneseq
      %v943 = vshrl.u32 %v942, 7
      %v944 = vsub.s32 %v735, %v943
      %v945 = vrot.slane %v191, %v944
      %v946 = vsel %vm740, %v945, %v941
      %v947 = vlaneseq
      %v948 = vshrl.u32 %v947, 7
      %v949 = vsub.s32 %v742, %v948
      %v950 = vrot.slane %v194, %v949
      %v951 = vsel %vm747, %v950, %v946
      %v952 = vlaneseq
      %v953 = vshrl.u32 %v952, 7
      %v954 = vsub.s32 %v723, %v953
      %v955 = vrot.slane %v197, %v954
      %v956 = vlaneseq
      %v957 = vshrl.u32 %v956, 7
      %v958 = vsub.s32 %v728, %v957
      %v959 = vrot.slane %v200, %v958
      %v960 = vsel %vm733, %v959, %v955
      %v961 = vlaneseq
      %v962 = vshrl.u32 %v961, 7
      %v963 = vsub.s32 %v735, %v962
      %v964 = vrot.slane %v203, %v963
      %v965 = vsel %vm740, %v964, %v960
      %v966 = vlaneseq
      %v967 = vshrl.u32 %v966, 7
      %v968 = vsub.s32 %v742, %v967
      %v969 = vrot.slane %v206, %v968
      %v970 = vsel %vm747, %v969, %v965
      %v971 = vlaneseq
      %v972 = vshrl.u32 %v971, 7
      %v973 = vsub.s32 %v723, %v972
      %v974 = vrot.slane %v209, %v973
      %v975 = vlaneseq
      %v976 = vshrl.u32 %v975, 7
      %v977 = vsub.s32 %v728, %v976
      %v978 = vrot.slane %v212, %v977
      %v979 = vsel %vm733, %v978, %v974
      %v980 = vlaneseq
      %v981 = vshrl.u32 %v980, 7
      %v982 = vsub.s32 %v735, %v981
      %v983 = vrot.slane %v215, %v982
      %v984 = vsel %vm740, %v983, %v979
      %v985 = vlaneseq
      %v986 = vshrl.u32 %v985, 7
      %v987 = vsub.s32 %v742, %v986
      %v988 = vrot.slane %v218, %v987
      %v989 = vsel %vm747, %v988, %v984
      %v990 = vlaneseq
      %v991 = vshrl.u32 %v990, 7
      %v992 = vsub.s32 %v723, %v991
      %v993 = vrot.slane %v221, %v992
      %v994 = vlaneseq
      %v995 = vshrl.u32 %v994, 7
      %v996 = vsub.s32 %v728, %v995
      %v997 = vrot.slane %v224, %v996
      %v998 = vsel %vm733, %v997, %v993
      %v999 = vlaneseq
      %v1000 = vshrl.u32 %v999, 7
      %v1001 = vsub.s32 %v735, %v1000
      %v1002 = vrot.slane %v227, %v1001
      %v1003 = vsel %vm740, %v1002, %v998
      %v1004 = vlaneseq
      %v1005 = vshrl.u32 %v1004, 7
      %v1006 = vsub.s32 %v742, %v1005
      %v1007 = vrot.slane %v230, %v1006
      %v1008 = vsel %vm747, %v1007, %v1003
      %v1009 = vlaneseq
      %v1010 = vshrl.u32 %v1009, 7
      %v1011 = vsub.s32 %v723, %v1010
      %v1012 = vrot.slane %v233, %v1011
      %v1013 = vlaneseq
      %v1014 = vshrl.u32 %v1013, 7
      %v1015 = vsub.s32 %v728, %v1014
      %v1016 = vrot.slane %v236, %v1015
      %v1017 = vsel %vm733, %v1016, %v1012
      %v1018 = vlaneseq
      %v1019 = vshrl.u32 %v1018, 7
      %v1020 = vsub.s32 %v735, %v1019
      %v1021 = vrot.slane %v239, %v1020
      %v1022 = vsel %vm740, %v1021, %v1017
      %v1023 = vlaneseq
      %v1024 = vshrl.u32 %v1023, 7
      %v1025 = vsub.s32 %v742, %v1024
      %v1026 = vrot.slane %v242, %v1025
      %v1027 = vsel %vm747, %v1026, %v1022
      %v1028 = vlaneseq
      %v1029 = vshrl.u32 %v1028, 7
      %v1030 = vsub.s32 %v723, %v1029
      %v1031 = vrot.slane %v245, %v1030
      %v1032 = vlaneseq
      %v1033 = vshrl.u32 %v1032, 7
      %v1034 = vsub.s32 %v728, %v1033
      %v1035 = vrot.slane %v248, %v1034
      %v1036 = vsel %vm733, %v1035, %v1031
      %v1037 = vlaneseq
      %v1038 = vshrl.u32 %v1037, 7
      %v1039 = vsub.s32 %v735, %v1038
      %v1040 = vrot.slane %v251, %v1039
      %v1041 = vsel %vm740, %v1040, %v1036
      %v1042 = vlaneseq
      %v1043 = vshrl.u32 %v1042, 7
      %v1044 = vsub.s32 %v742, %v1043
      %v1045 = vrot.slane %v254, %v1044
      %v1046 = vsel %vm747, %v1045, %v1041
      %v1047 = vlaneseq
      %v1048 = vshrl.u32 %v1047, 7
      %v1049 = vsub.s32 %v723, %v1048
      %v1050 = vrot.slane %v257, %v1049
      %v1051 = vlaneseq
      %v1052 = vshrl.u32 %v1051, 7
      %v1053 = vsub.s32 %v728, %v1052
      %v1054 = vrot.slane %v260, %v1053
      %v1055 = vsel %vm733, %v1054, %v1050
      %v1056 = vlaneseq
      %v1057 = vshrl.u32 %v1056, 7
      %v1058 = vsub.s32 %v735, %v1057
      %v1059 = vrot.slane %v263, %v1058
      %v1060 = vsel %vm740, %v1059, %v1055
      %v1061 = vlaneseq
      %v1062 = vshrl.u32 %v1061, 7
      %v1063 = vsub.s32 %v742, %v1062
      %v1064 = vrot.slane %v266, %v1063
      %v1065 = vsel %vm747, %v1064, %v1060
      %v1066 = vlaneseq
      %v1067 = vshrl.u32 %v1066, 7
      %v1068 = vsub.s32 %v723, %v1067
      %v1069 = vrot.slane %v269, %v1068
      %v1070 = vlaneseq
      %v1071 = vshrl.u32 %v1070, 7
      %v1072 = vsub.s32 %v728, %v1071
      %v1073 = vrot.slane %v272, %v1072
      %v1074 = vsel %vm733, %v1073, %v1069
      %v1075 = vlaneseq
      %v1076 = vshrl.u32 %v1075, 7
      %v1077 = vsub.s32 %v735, %v1076
      %v1078 = vrot.slane %v275, %v1077
      %v1079 = vsel %vm740, %v1078, %v1074
      %v1080 = vlaneseq
      %v1081 = vshrl.u32 %v1080, 7
      %v1082 = vsub.s32 %v742, %v1081
      %v1083 = vrot.slane %v278, %v1082
      %v1084 = vsel %vm747, %v1083, %v1079
      %v1085 = vsel %vm882, %v970, %v951
      %v1086 = vsel %vm884, %v989, %v1085
      %v1087 = vsel %vm886, %v1008, %v1086
      %v1088 = vsel %vm888, %v1027, %v1087
      %v1089 = vsel %vm890, %v1046, %v1088
      %v1090 = vsel %vm892, %v1065, %v1089
      %v1091 = vsel %vm894, %v1084, %v1090
      %v1093 = vmin.f32 %v900, %v1091
      %1094 = vst.msk [vmem:[#allocation3] sm:$0xff] %vm898, %v1093
    $region41: #{tpu_custom_call.1} parent=1 // pred_fallthru
      _
    // Predicated region
    $region42: #{tpu_custom_call.1} parent=1 // pred_check
      %p1095 = pneg %p279
    $region43: #{tpu_custom_call.1} parent=1 // pred_check_branch
      %1097 = sbr.rel (%p1095) target = $region45
    $region44: #{tpu_custom_call.1} parent=1 // pred_region
      %v1098 = vld [vmem:[%s1] sm:$0x1]
      %v1099 = vld [vmem:[%s2] sm:$0x1]
      %vm1100 = vcmp.ge.f32.partialorder %v1098, 0.0
      %v1101 = vld [vmem:[#allocation2] sm:$0xff]
      %v1102 = vld [vmem:[#allocation3] sm:$0xff]
      %v1103 = vsel %vm1100, 1, 0
      %v1104 = vlaneseq
      %v1105 = vshrl.u32 %v1104, 7
      %v1106 = vsub.s32 0, %v1105
      %v1107 = vrot.slane %v1103, %v1106
      %vm1108 = vcmp.eq.s32.totalorder %v1107, 1
      %v1109 = vsel %vm1108, %v1101, %v1102
      %v1111 = vlaneseq
      %v1112 = vshrl.u32 %v1111, 7
      %v1113 = vsub.s32 0, %v1112
      %v1114 = vrot.slane %v1098, %v1113
      %v1116 = vmul.f32 %v1109, %v1114
      %v1118 = vlaneseq
      %v1119 = vshrl.u32 %v1118, 7
      %v1120 = vsub.s32 0, %v1119
      %v1121 = vrot.slane %v1099, %v1120
      %v1123 = vadd.f32 %v1116, %v1121
      %v1124 = vmax.f32 %v1123, 0.0
      %v1125 = vld [vmem:[#allocation7] sm:$0xff]
      %v1126 = vld [vmem:[#allocation7 + $0x8] sm:$0xff]
      %v1127 = vld [vmem:[#allocation7 + $0x10] sm:$0xff]
      %v1128 = vld [vmem:[#allocation7 + $0x18] sm:$0xff]
      %v1129 = vld [vmem:[%s4] sm:$0x1]
      %v1131 = vlaneseq
      %v1132 = vshrl.u32 %v1131, 7
      %v1133 = vsub.s32 0, %v1132
      %v1134 = vrot.slane %v1129, %v1133
      %vm1136 = vcmask 261120
      %v1138 = vsel %vm1136, %v1124, 0
      %1140 = vmatprep.subr.mxu0 0.0
      %1141 = vmatpush1.msra.mxu0 0.0
      %1142 = vmatprep.subr.mxu0 0.0
      %1143 = vmatpush1.msra.mxu0 0.0
      %1144 = vmatprep.subr.mxu0 0.0
      %1145 = vmatpush1.msra.mxu0 0.0
      %1146 = vmatprep.subr.mxu0 0.0
      %1147 = vmatpush1.msra.mxu0 0.0
      %1148 = vmatprep.subr.mxu0 0.0
      %1149 = vmatpush1.msra.mxu0 0.0
      %1150 = vmatprep.subr.mxu0 0.0
      %1151 = vmatpush1.msra.mxu0 0.0
      %1152 = vmatprep.subr.mxu0 0.0
      %1153 = vmatpush1.msra.mxu0 0.0
      %1154 = vmatprep.subr.mxu0 0.0
      %1155 = vmatpush1.msra.mxu0 0.0
      %1156 = vmatprep.subr.mxu0 0.0
      %1157 = vmatpush1.msra.mxu0 0.0
      %1158 = vmatprep.subr.mxu0 0.0
      %1159 = vmatpush1.msra.mxu0 0.0
      %1160 = vmatprep.subr.mxu0 0.0
      %1161 = vmatpush1.msra.mxu0 0.0
      %1162 = vmatprep.subr.mxu0 0.0
      %1163 = vmatpush1.msra.mxu0 0.0
      %1164 = vmatprep.subr.mxu0 0.0
      %1165 = vmatpush1.msra.mxu0 %v1128
      %1166 = vmatprep.subr.mxu0 0.0
      %1167 = vmatpush1.msra.mxu0 %v1127
      %1168 = vmatprep.subr.mxu0 0.0
      %1169 = vmatpush1.msra.mxu0 %v1126
      %1170 = vmatprep.subr.mxu0 0.0
      %1171 = vmatpush1.msra.mxu0 %v1125
      %1172 = vmatprep.subr.mxu0 0.0
      %1173 = vmatpush2.msra.mxu0 0.0
      %1174 = vmatprep.subr.mxu0 0.0
      %1175 = vmatpush2.msra.mxu0 0.0
      %1176 = vmatprep.subr.mxu0 0.0
      %1177 = vmatpush2.msra.mxu0 0.0
      %1178 = vmatprep.subr.mxu0 0.0
      %1179 = vmatpush2.msra.mxu0 0.0
      %1180 = vmatprep.subr.mxu0 0.0
      %1181 = vmatpush2.msra.mxu0 0.0
      %1182 = vmatprep.subr.mxu0 0.0
      %1183 = vmatpush2.msra.mxu0 0.0
      %1184 = vmatprep.subr.mxu0 0.0
      %1185 = vmatpush2.msra.mxu0 0.0
      %1186 = vmatprep.subr.mxu0 0.0
      %1187 = vmatpush2.msra.mxu0 0.0
      %1188 = vmatprep.subr.mxu0 0.0
      %1189 = vmatpush2.msra.mxu0 0.0
      %1190 = vmatprep.subr.mxu0 0.0
      %1191 = vmatpush2.msra.mxu0 0.0
      %1192 = vmatprep.subr.mxu0 0.0
      %1193 = vmatpush2.msra.mxu0 0.0
      %1194 = vmatprep.subr.mxu0 0.0
      %1195 = vmatpush2.msra.mxu0 0.0
      %1196 = vmatprep.subr.mxu0 0.0
      %1197 = vmatpush2.msra.mxu0 0.0
      %1198 = vmatprep.subr.mxu0 0.0
      %1199 = vmatpush2.msra.mxu0 0.0
      %1200 = vmatprep.subr.mxu0 0.0
      %1201 = vmatpush2.msra.mxu0 0.0
      %1202 = vmatprep.subr.mxu0 0.0
      %1203 = vmatpush2.msra.mxu0 0.0
      %1204 = vmatprep.mubr.f32.mxu0 0.0
      %1205 = vmatmul.mubr.f32.gmra.mxu0 %v1138
      %v1206 = vpop.f32.mrf.mxu0
      %v1207 = vadd.f32 %v1134, %v1206
      %v1208 = vpop.f32.mrf.mxu0
      %1209 = vdwg.mxu0
      %1210 = vst [vmem:[#allocation9] sm:$0xff] %v1207
      %v1211 = vlaneseq
      %v1212 = vand.u32 %v1211, 127
      %vm1213 = vcmp.lt.s32.totalorder %v1212, 10
      %v1214 = vsel %vm1213, %v1207, -1e+30
      %1215 = vmax.xlane.f32.xlu0 %v1214
      %v1216 = vpop.xlane.xlu0 %1215
      %v1217 = vsub.f32 %v1214, %v1216
      %v1218 = vmul.f32 %v1217, 1.442695
      %v1219 = vpow.pop %v1218
      %1220 = vadd.xlane.f32.xlu0 %v1219
      %v1221 = vpop.xlane.xlu0 %1220
      %v1222 = vlog2.pop %v1221
      %v1223 = vmul.f32 %v1222, 0.6931472
      %v1224 = vld [vmem:[%s5] sm:$0xff]
      %1225 = vset.pattern.permute.xlu0 0
      %1226 = vperm.xlu0 %1225, %v1224
      %v1227 = vpop.permute.xlu0 %1226
      %vm1228 = vcmp.eq.s32.totalorder %v1212, %v1227
      %v1229 = vsel %vm1228, %v1217, 0.0
      %1230 = vadd.xlane.f32.xlu0 %v1229
      %v1231 = vpop.xlane.xlu0 %1230
      %v1232 = vsub.f32 %v1223, %v1231
      %vm1233 = vcmask 7168
      %1234 = vst.msk [vmem:[%s7] sm:$0xff] %vm1233, %v1232
    $region45: #{tpu_custom_call.1} parent=1 // pred_fallthru
      _
    // Predicated region
    $region46: #{tpu_custom_call.1} parent=1 // pred_check
      _
    $region47: #{tpu_custom_call.1} parent=1 // pred_check_branch
      %1236 = sbr.rel (0) target = $region49
    $region48: #{tpu_custom_call.1} parent=1 // pred_region
      %s1238 = ssub.s32 128, 128
      %1239 = vsyncadd [#allocation6], %s1238
      %s1241 = sshll.u32 [#allocation9], 4
      %s1242 = int_to_ptr.vmem [resolvable:$true] %s1241
      %1244 = dma.vmem_to_hbm [thread:$0]  %s1242, 128, %s6, [#allocation6]
    $region49: #{tpu_custom_call.1} parent=1 // pred_fallthru
      _
    // Predicated region
    $region50: #{tpu_custom_call.1} parent=1 // pred_check
      _
    $region51: #{tpu_custom_call.1} parent=1 // pred_check_branch
      %1246 = sbr.rel (0) target = $region53
    $region52: #{tpu_custom_call.1} parent=1 // pred_region
      _
    $region53: #{tpu_custom_call.1} parent=1 // pred_fallthru
      _
    // Predicated region
    $region54: #{tpu_custom_call.1} parent=1 // pred_check
      _
    $region55: #{tpu_custom_call.1} parent=1 // pred_check_branch
      %1248 = sbr.rel (0) target = $region57
    $region56: #{tpu_custom_call.1} parent=1 // pred_region
      %1249 = dma.done [#allocation6], 128
    $region57: #{tpu_custom_call.1} parent=1 // pred_fallthru
      _
    // Predicated region
    $region58: #{tpu_custom_call.1} parent=1 // pred_check
      _
    $region59: #{tpu_custom_call.1} parent=1 // pred_check_branch
      %1251 = sbr.rel (0) target = $region61
    $region60: #{tpu_custom_call.1} parent=1 // pred_region
      _
    $region61: #{tpu_custom_call.1} parent=1 // pred_fallthru
      _
    %1252 = vsyncpa [#allocation5], 1
    %1253 = vsyncpa [#allocation8], 1
    %1254 = vsyncpa [#allocation6], 1

</llo_original>
